<compile_context>
chip_gen: v6e
topology: v6e:2x2x1
jax: 0.10.0
libtpu: 0.0.40
codegen_flags: <defaults>
</compile_context>

<pallas_src>
import functools
import math

import jax
import jax.numpy as jnp
from jax.experimental import pallas as pl
from jax.experimental.pallas import tpu as pltpu

EPS = 1e-5  # nn.LayerNorm default eps


def _round_up(x, m):
    return ((x + m - 1) // m) * m


def _vmem_capacity_bytes():
    try:
        cap = int(getattr(pltpu.get_tpu_info(), "vmem_capacity_bytes"))
        if cap > 0:
            return cap
    except Exception:
        pass
    return 64 * 1024 * 1024  # conservative (v7x per-TC VMEM)


def _prenorm_linear_kernel(x_ref, g_ref, b_ref, w_ref, fb_ref, o_ref, y_ref, *, eps):
    # x_ref: (tm, D) row tile   g/b: (1, D)   w: (D, tn)   fb: (1, tn)
    # y_ref: (tm, D) VMEM scratch holding LN(x)*gamma + beta in the MXU dtype.
    #
    # j (columns) is the inner "arbitrary" grid axis: the LayerNorm, affine and
    # the f32 -> MXU-dtype cast run once per row tile and are reused for every
    # output-column slab.
    @pl.when(pl.program_id(1) == 0)
    def _():
        x = x_ref[...].astype(jnp.float32)
        mean = jnp.mean(x, axis=-1, keepdims=True)
        xc = x - mean
        var = jnp.mean(xc * xc, axis=-1, keepdims=True)   # shifted two-pass variance
        xn = xc * jax.lax.rsqrt(var + eps)
        y = xn * g_ref[...].astype(jnp.float32) + b_ref[...].astype(jnp.float32)
        y_ref[...] = y.astype(y_ref.dtype)

    out = jnp.dot(y_ref[...], w_ref[...], preferred_element_type=jnp.float32)
    o_ref[...] = (out + fb_ref[...].astype(jnp.float32)).astype(o_ref.dtype)


def prenorm_fn(x, gamma, beta, w, fn_bias, *, tm=None, mxu_dtype=None):
    """Fused LayerNorm(x) @ w + fn_bias over the last axis of x."""
    orig_shape = x.shape
    D = orig_shape[-1]
    M = math.prod(orig_shape[:-1]) if len(orig_shape) > 1 else 1

    x_itemsize = jnp.dtype(x.dtype).itemsize
    out_itemsize = x_itemsize
    if mxu_dtype is None:
        mxu_dtype = w.dtype           # keep GEMM operands in the weight dtype
    mxu_dtype = jnp.dtype(mxu_dtype)  # pass jnp.bfloat16 to force bf16 MXU path
    mxu_itemsize = mxu_dtype.itemsize

    # ---- generation-aware VMEM ceiling (leave headroom for compiler scratch) -
    vmem_ceiling = int(_vmem_capacity_bytes() * 0.8)

    # ---- row tile tm: budget-driven, sublane-aligned -------------------------
    row_align = 8 if x_itemsize >= 4 else (16 if x_itemsize == 2 else 32)
    if tm is None:
        tm_by_vmem = (vmem_ceiling // 3) // max(1, 2 * D * x_itemsize)
        tm = min(512 if x_itemsize >= 4 else 1024, max(row_align, tm_by_vmem))
    tm = min(tm, _round_up(M, row_align))
    tm = max(row_align, (tm // row_align) * row_align)
    Mp = _round_up(M, tm)

    # ---- column tile tn: full-weight resident when it fits, else 256 / 128 ---
    if D % 128 != 0:
        tn = D                                     # full block (legal: equals array dim)
    elif 2 * D * D * mxu_itemsize <= vmem_ceiling // 2:
        tn = D                                     # whole weight resident, single DMA
    elif D % 256 == 0:
        tn = 256                                   # full MXU width on v6e/v7x
    else:
        tn = 128
    nj = D // tn

    # ---- operands: pad rows only when needed; never pad the feature axis -----
    x2 = x.reshape(M, D)
    xp = x2 if Mp == M else jnp.zeros((Mp, D), x.dtype).at[:M].set(x2)
    g2 = gamma.reshape(1, D)
    b2 = beta.reshape(1, D)
    fb2 = fn_bias.reshape(1, D)
    w_mm = w if w.dtype == mxu_dtype else w.astype(mxu_dtype)

    grid = (Mp // tm, nj)

    vmem_need = (2 * tm * D * x_itemsize          # x row tiles (double buffered)
                 + 2 * D * tn * mxu_itemsize      # weight slab(s)
                 + 2 * tm * tn * out_itemsize     # output tiles
                 + tm * D * mxu_itemsize          # y scratch
                 + 8 * D * 4)                     # gamma / beta / bias
    vmem_limit = int(min(max(vmem_need + (4 << 20), 32 << 20), vmem_ceiling))

    w_bytes = D * D * mxu_itemsize if tn == D else (Mp // tm) * D * D * mxu_itemsize
    cost = pl.CostEstimate(
        flops=2 * Mp * D * D + 8 * Mp * D,
        transcendentals=Mp,
        bytes_accessed=Mp * D * x_itemsize + w_bytes + Mp * D * out_itemsize + 4 * D * 4,
    )

    kernel = functools.partial(_prenorm_linear_kernel, eps=EPS)

    if tn == D:
        w_spec = pl.BlockSpec((D, D), lambda i, j: (0, 0))      # single resident copy
    else:
        w_spec = pl.BlockSpec((D, tn), lambda i, j: (0, j))     # column slabs

    out = pl.pallas_call(
        kernel,
        out_shape=jax.ShapeDtypeStruct((Mp, D), x.dtype),
        grid_spec=pltpu.PrefetchScalarGridSpec(
            num_scalar_prefetch=0,
            grid=grid,
            in_specs=[
                pl.BlockSpec((tm, D), lambda i, j: (i, 0)),     # x rows (no re-DMA over j)
                pl.BlockSpec((1, D), lambda i, j: (0, 0)),      # gamma (constant)
                pl.BlockSpec((1, D), lambda i, j: (0, 0)),      # beta  (constant)
                w_spec,                                         # weight
                pl.BlockSpec((1, tn), lambda i, j: (0, j)),     # fn bias slab
            ],
            out_specs=pl.BlockSpec((tm, tn), lambda i, j: (i, j)),
            scratch_shapes=[pltpu.VMEM((tm, D), mxu_dtype)],    # cached LN(x)*g + b
        ),
        compiler_params=pltpu.CompilerParams(
            dimension_semantics=("parallel", "arbitrary"),
            vmem_limit_bytes=vmem_limit,
        ),
        cost_estimate=cost,
    )(xp, g2, b2, w_mm, fb2)

    out = out if Mp == M else out[:M]
    return out.reshape(orig_shape)


def prenorm_forward(x, params):
    """Mirrors PreNorm.forward: if given an (x, attn) pair, norm+fn the first
    element and pass `attn` through unchanged; otherwise norm+fn(x)."""
    gamma, beta, w, fb = params
    if isinstance(x, (tuple, list)) and len(x) == 2:
        x_in, attn = x
        return (prenorm_fn(x_in, gamma, beta, w, fb), attn)
    return prenorm_fn(x, gamma, beta, w, fb)


def _reference(x, gamma, beta, w, fb):
    xf = x.astype(jnp.float32)
    mean = jnp.mean(xf, axis=-1, keepdims=True)
    var = jnp.mean(jnp.square(xf - mean), axis=-1, keepdims=True)
    xn = (xf - mean) * jax.lax.rsqrt(var + EPS)
    y = xn * gamma.astype(jnp.float32) + beta.astype(jnp.float32)
    return (y @ w.astype(jnp.float32) + fb.astype(jnp.float32)).astype(x.dtype)


if __name__ == "__main__":
    key = jax.random.PRNGKey(0)
    k = jax.random.split(key, 10)

    # ---------------- small f32 case (batch != 2 avoids the `len(x)==2` quirk) -
    B, N, D = 4, 8, 32
    x = jax.random.normal(k[0], (B, N, D), dtype=jnp.float32)
    gamma = jnp.ones((D,), jnp.float32)               # PyTorch LayerNorm defaults
    beta = jnp.zeros((D,), jnp.float32)
    w = jax.random.normal(k[1], (D, D), dtype=jnp.float32) * (1.0 / math.sqrt(D))
    fb = jax.random.normal(k[2], (D,), dtype=jnp.float32) * 0.01
    params = (gamma, beta, w, fb)

    out = jax.block_until_ready(prenorm_forward(x, params))
    ref = _reference(x, gamma, beta, w, fb)
    assert jnp.allclose(out, ref, atol=1e-4, rtol=1e-4), "small-case mismatch"

    # (x, attn) tuple path
    attn = jax.random.normal(k[3], (B, N, N), dtype=jnp.float32)
    out2, attn_out = prenorm_forward((x, attn), params)
    out2 = jax.block_until_ready(out2)
    assert jnp.allclose(out2, ref, atol=1e-4, rtol=1e-4)
    assert attn_out is attn

    # ---------------- larger f32 case: row tiling + ragged tail padding; the
    # non-128-multiple feature dim (192) stays UNPADDED in HBM --------------
    B2, N2, D2 = 2, 300, 192
    xb = jax.random.normal(k[4], (B2, N2, D2), dtype=jnp.float32)
    g2 = 1.0 + 0.1 * jax.random.normal(k[5], (D2,), dtype=jnp.float32)
    b2 = 0.1 * jax.random.normal(k[6], (D2,), dtype=jnp.float32)
    w2 = jax.random.normal(k[7], (D2, D2), dtype=jnp.float32) * (1.0 / math.sqrt(D2))
    fb2 = jax.random.normal(k[8], (D2,), dtype=jnp.float32) * 0.01
    outb = jax.block_until_ready(prenorm_fn(xb, g2, b2, w2, fb2, tm=256))
    refb = _reference(xb, g2, b2, w2, fb2)
    assert jnp.allclose(outb, refb, atol=1e-4, rtol=1e-4), "tiled-case mismatch"

    # ---------------- bf16 case: bf16 MXU operands, f32 accumulation,
    # 16-row sublane alignment ------------------------------------------------
    D3 = 64
    xc = jax.random.normal(k[9], (B, N, D3), dtype=jnp.bfloat16)
    g3 = jnp.ones((D3,), jnp.bfloat16)
    b3 = jnp.zeros((D3,), jnp.bfloat16)
    w3 = (jax.random.normal(k[1], (D3, D3), dtype=jnp.float32)
          * (1.0 / math.sqrt(D3))).astype(jnp.bfloat16)
    fb3 = jnp.zeros((D3,), jnp.bfloat16)
    outc = jax.block_until_ready(prenorm_fn(xc, g3, b3, w3, fb3))
    refc = _reference(xc, g3, b3, w3, fb3)
    assert jnp.allclose(outc.astype(jnp.float32), refc.astype(jnp.float32),
                        atol=1e-1, rtol=5e-2), "bf16-case mismatch"

    print("KERNEL_OK")
</pallas_src>

<mosaic_0001>
module attributes {stable_mosaic.version = 11 : i64} {
  func.func @_prenorm_linear_kernel(%arg0: i32, %arg1: i32, %arg2: memref<32x32xf32, #tpu.memory_space<vmem>>, %arg3: memref<1x32xf32, #tpu.memory_space<vmem>>, %arg4: memref<1x32xf32, #tpu.memory_space<vmem>>, %arg5: memref<32x32xf32, #tpu.memory_space<vmem>>, %arg6: memref<1x32xf32, #tpu.memory_space<vmem>>, %arg7: memref<32x32xf32, #tpu.memory_space<vmem>>, %arg8: memref<32x32xf32, #tpu.memory_space<vmem>>) attributes {dimension_semantics = [#tpu.dimension_semantics<parallel>, #tpu.dimension_semantics<arbitrary>], iteration_bounds = array<i64: 1, 1>, scalar_prefetch = 0 : i64, scratch_operands = 1 : i64, tpu.core_type = #tpu.core_type<tc>, window_params = [{transform_indices = @transform_0, window_bounds = array<i64: 32, 32>}, {pipeline_mode = #tpu.pipeline_mode<synchronous>, transform_indices = @transform_1, window_bounds = array<i64: 1, 32>}, {pipeline_mode = #tpu.pipeline_mode<synchronous>, transform_indices = @transform_2, window_bounds = array<i64: 1, 32>}, {pipeline_mode = #tpu.pipeline_mode<synchronous>, transform_indices = @transform_3, window_bounds = array<i64: 32, 32>}, {transform_indices = @transform_4, window_bounds = array<i64: 1, 32>}, {transform_indices = @transform_5, window_bounds = array<i64: 32, 32>}]} {
    %c0_i32 = arith.constant 0 : i32
    %0 = arith.cmpi eq, %arg1, %c0_i32 : i32
    %1 = arith.extui %0 : i1 to i32
    %c0_i32_0 = arith.constant 0 : i32
    %2 = arith.cmpi ne, %1, %c0_i32_0 : i32
    scf.if %2 {
      %c0_8 = arith.constant 0 : index
      %c0_9 = arith.constant 0 : index
      %10 = vector.load %arg2[%c0_8, %c0_9] : memref<32x32xf32, #tpu.memory_space<vmem>>, vector<32x32xf32>
      %cst_10 = arith.constant dense<0.000000e+00> : vector<32xf32>
      %11 = vector.multi_reduction <add>, %10, %cst_10 [1] : vector<32x32xf32> to vector<32xf32>
      %12 = vector.shape_cast %11 : vector<32xf32> to vector<32x1xf32>
      %cst_11 = arith.constant 3.200000e+01 : f32
      %13 = vector.broadcast %cst_11 : f32 to vector<32x1xf32>
      %14 = arith.divf %12, %13 : vector<32x1xf32>
      %15 = vector.broadcast %14 : vector<32x1xf32> to vector<32x32xf32>
      %16 = arith.subf %10, %15 : vector<32x32xf32>
      %17 = arith.mulf %16, %16 : vector<32x32xf32>
      %cst_12 = arith.constant dense<0.000000e+00> : vector<32xf32>
      %18 = vector.multi_reduction <add>, %17, %cst_12 [1] : vector<32x32xf32> to vector<32xf32>
      %19 = vector.shape_cast %18 : vector<32xf32> to vector<32x1xf32>
      %cst_13 = arith.constant 3.200000e+01 : f32
      %20 = vector.broadcast %cst_13 : f32 to vector<32x1xf32>
      %21 = arith.divf %19, %20 : vector<32x1xf32>
      %cst_14 = arith.constant 9.99999974E-6 : f32
      %22 = vector.broadcast %cst_14 : f32 to vector<32x1xf32>
      %23 = arith.addf %21, %22 : vector<32x1xf32>
      %24 = math.rsqrt %23 : vector<32x1xf32>
      %25 = vector.broadcast %24 : vector<32x1xf32> to vector<32x32xf32>
      %26 = arith.mulf %16, %25 : vector<32x32xf32>
      %c0_15 = arith.constant 0 : index
      %c0_16 = arith.constant 0 : index
      %27 = vector.load %arg3[%c0_15, %c0_16] : memref<1x32xf32, #tpu.memory_space<vmem>>, vector<1x32xf32>
      %28 = vector.broadcast %27 : vector<1x32xf32> to vector<32x32xf32>
      %29 = arith.mulf %26, %28 : vector<32x32xf32>
      %c0_17 = arith.constant 0 : index
      %c0_18 = arith.constant 0 : index
      %30 = vector.load %arg4[%c0_17, %c0_18] : memref<1x32xf32, #tpu.memory_space<vmem>>, vector<1x32xf32>
      %31 = vector.broadcast %30 : vector<1x32xf32> to vector<32x32xf32>
      %32 = arith.addf %29, %31 : vector<32x32xf32>
      %c0_19 = arith.constant 0 : index
      %c0_20 = arith.constant 0 : index
      %33 = vector.load %arg8[%c0_19, %c0_20] : memref<32x32xf32, #tpu.memory_space<vmem>>, vector<32x32xf32>
      tpu.vector_store %arg8[%c0_19, %c0_20], %32 {strides = array<i32>} : memref<32x32xf32, #tpu.memory_space<vmem>>, vector<32x32xf32>,
    } else {
    }
    %c0 = arith.constant 0 : index
    %c0_1 = arith.constant 0 : index
    %3 = vector.load %arg8[%c0, %c0_1] : memref<32x32xf32, #tpu.memory_space<vmem>>, vector<32x32xf32>
    %c0_2 = arith.constant 0 : index
    %c0_3 = arith.constant 0 : index
    %4 = vector.load %arg5[%c0_2, %c0_3] : memref<32x32xf32, #tpu.memory_space<vmem>>, vector<32x32xf32>
    %cst = arith.constant dense<0.000000e+00> : vector<32x32xf32>
    %5 = tpu.matmul %3, %4, %cst {dimension_numbers = #tpu.dot_dimension_numbers<[1], [0], [0], [1], [0, 0, 1, 1], [], []>} : vector<32x32xf32>, vector<32x32xf32>, vector<32x32xf32> -> vector<32x32xf32>
    %c0_4 = arith.constant 0 : index
    %c0_5 = arith.constant 0 : index
    %6 = vector.load %arg6[%c0_4, %c0_5] : memref<1x32xf32, #tpu.memory_space<vmem>>, vector<1x32xf32>
    %7 = vector.broadcast %6 : vector<1x32xf32> to vector<32x32xf32>
    %8 = arith.addf %5, %7 : vector<32x32xf32>
    %c0_6 = arith.constant 0 : index
    %c0_7 = arith.constant 0 : index
    %9 = vector.load %arg7[%c0_6, %c0_7] : memref<32x32xf32, #tpu.memory_space<vmem>>, vector<32x32xf32>
    tpu.vector_store %arg7[%c0_6, %c0_7], %8 {strides = array<i32>} : memref<32x32xf32, #tpu.memory_space<vmem>>, vector<32x32xf32>,
    return
  }
  func.func @transform_0(%arg0: i32, %arg1: i32) -> (i32, i32) {
    %c0_i32 = arith.constant 0 : i32
    %c0_i32_0 = arith.constant 0 : i32
    return %arg0, %c0_i32 : i32, i32
  }
  func.func @transform_1(%arg0: i32, %arg1: i32) -> (i32, i32) {
    %c0_i32 = arith.constant 0 : i32
    %c0_i32_0 = arith.constant 0 : i32
    %c0_i32_1 = arith.constant 0 : i32
    return %c0_i32, %c0_i32_0 : i32, i32
  }
  func.func @transform_2(%arg0: i32, %arg1: i32) -> (i32, i32) {
    %c0_i32 = arith.constant 0 : i32
    %c0_i32_0 = arith.constant 0 : i32
    %c0_i32_1 = arith.constant 0 : i32
    return %c0_i32, %c0_i32_0 : i32, i32
  }
  func.func @transform_3(%arg0: i32, %arg1: i32) -> (i32, i32) {
    %c0_i32 = arith.constant 0 : i32
    %c0_i32_0 = arith.constant 0 : i32
    %c0_i32_1 = arith.constant 0 : i32
    return %c0_i32, %c0_i32_0 : i32, i32
  }
  func.func @transform_4(%arg0: i32, %arg1: i32) -> (i32, i32) {
    %c0_i32 = arith.constant 0 : i32
    %c0_i32_0 = arith.constant 0 : i32
    return %c0_i32, %arg1 : i32, i32
  }
  func.func @transform_5(%arg0: i32, %arg1: i32) -> (i32, i32) {
    %c0_i32 = arith.constant 0 : i32
    return %arg0, %arg1 : i32, i32
  }
}

</mosaic_0001>

<llo_original>
// kernel: tpu_custom_call.1
$region0: #{tpu_custom_call.1}
  #allocation0 [shape = 'u32[]', space=smem, size = 0x4, offset = 0x4, fixed_abs, tag = 'smem constant byte address 0x4 - core index']
  #allocation1 [shape = 'u32[144,128]{1,0:T(1,128)}', space=vmem, size = 0x12000, scoped, tag = 'internal scratch']
  #allocation2 [shape = 'f32[32,32]{1,0:T(8,128)}', space=vmem, size = 0x4000, scoped, tag = 'scratch operand']
  %s0 = inlined_call_operand.hbm [shape: f32[32,32], index: 0, kind: input, shape index: {}]
  %s1 = inlined_call_operand.vmem [shape: f32[1,32], index: 1, kind: input, shape index: {}]
  %s2 = inlined_call_operand.vmem [shape: f32[1,32], index: 2, kind: input, shape index: {}]
  %s3 = inlined_call_operand.hbm [shape: f32[32,32], index: 3, kind: input, shape index: {}]
  %s4 = inlined_call_operand.vmem [shape: f32[1,32], index: 4, kind: input, shape index: {}]
  %s5 = inlined_call_operand.hbm [shape: f32[32,32], index: 5, kind: output, shape index: {}]
  %s6 = sld [smem:[#allocation0]]
  $region42: #{tpu_custom_call.1} parent=0
    _
  %s8 = ssub.s32 1, %s6
  %s9 = scalar_select 0, %s8, %s6
  $region1: #{tpu_custom_call.1} parent=0
    #allocation3 [shape = 'u8[16384]{0}', space=vmem, size = 0x4000, scoped, tag = 'input window, operand 0, single buffered']
    #allocation4 [shape = 's32[1]{0}', space=sflag, size = 0x4, scoped, tag = 'scoped memory for tpu_custom_call.1']
    #allocation5 [shape = 's32[1]{0}', space=sflag, size = 0x4, scoped, tag = 'scoped memory for tpu_custom_call.1']
    #allocation6 [shape = 'u8[16384]{0}', space=vmem, size = 0x4000, scoped, tag = 'input window, operand 3, single buffered']
    #allocation7 [shape = 's32[1]{0}', space=sflag, size = 0x4, scoped, tag = 'scoped memory for tpu_custom_call.1']
    #allocation8 [shape = 'u8[16384]{0}', space=vmem, size = 0x4000, scoped, tag = 'output window, operand 0, single buffered']
    %10 = vsyncpa [#allocation4], 0
    %11 = vsyncpa [#allocation7], 0
    %12 = vsyncpa [#allocation5], 0
    // Predicated region
    $region2: #{tpu_custom_call.1} parent=1 // pred_check
      _
    $region3: #{tpu_custom_call.1} parent=1 // pred_check_branch
      %14 = sbr.rel (0) target = $region5
    $region4: #{tpu_custom_call.1} parent=1 // pred_region
      %s16 = ssub.s32 512, 512
      %17 = vsyncadd [#allocation4], %s16
      %s18 = sshll.u32 [#allocation3], 4
      %s19 = int_to_ptr.vmem [resolvable:$true] %s18
      %24 = dma.hbm_to_vmem [thread:$0]  %s0, 512, %s19, [#allocation4], 128, 128, 8
    $region5: #{tpu_custom_call.1} parent=1 // pred_fallthru
      _
    // Predicated region
    $region6: #{tpu_custom_call.1} parent=1 // pred_check
      _
    $region7: #{tpu_custom_call.1} parent=1 // pred_check_branch
      %26 = sbr.rel (0) target = $region9
    $region8: #{tpu_custom_call.1} parent=1 // pred_region
      _
    $region9: #{tpu_custom_call.1} parent=1 // pred_fallthru
      _
    // Predicated region
    $region10: #{tpu_custom_call.1} parent=1 // pred_check
      _
    $region11: #{tpu_custom_call.1} parent=1 // pred_check_branch
      %28 = sbr.rel (0) target = $region13
    $region12: #{tpu_custom_call.1} parent=1 // pred_region
      _
    $region13: #{tpu_custom_call.1} parent=1 // pred_fallthru
      _
    // Predicated region
    $region14: #{tpu_custom_call.1} parent=1 // pred_check
      _
    $region15: #{tpu_custom_call.1} parent=1 // pred_check_branch
      %30 = sbr.rel (0) target = $region17
    $region16: #{tpu_custom_call.1} parent=1 // pred_region
      %s32 = ssub.s32 512, 512
      %33 = vsyncadd [#allocation7], %s32
      %s34 = sshll.u32 [#allocation6], 4
      %s35 = int_to_ptr.vmem [resolvable:$true] %s34
      %40 = dma.hbm_to_vmem [thread:$0]  %s3, 512, %s35, [#allocation7], 128, 128, 8
    $region17: #{tpu_custom_call.1} parent=1 // pred_fallthru
      _
    // Predicated region
    $region18: #{tpu_custom_call.1} parent=1 // pred_check
      _
    $region19: #{tpu_custom_call.1} parent=1 // pred_check_branch
      %42 = sbr.rel (0) target = $region21
    $region20: #{tpu_custom_call.1} parent=1 // pred_region
      _
    $region21: #{tpu_custom_call.1} parent=1 // pred_fallthru
      _
    // Predicated region
    $region22: #{tpu_custom_call.1} parent=1 // pred_check
      _
    $region23: #{tpu_custom_call.1} parent=1 // pred_check_branch
      %44 = sbr.rel (0) target = $region25
    $region24: #{tpu_custom_call.1} parent=1 // pred_region
      %45 = dma.done [#allocation4], 512
    $region25: #{tpu_custom_call.1} parent=1 // pred_fallthru
      _
    // Predicated region
    $region26: #{tpu_custom_call.1} parent=1 // pred_check
      _
    $region27: #{tpu_custom_call.1} parent=1 // pred_check_branch
      %47 = sbr.rel (0) target = $region29
    $region28: #{tpu_custom_call.1} parent=1 // pred_region
      %48 = dma.done [#allocation7], 512
    $region29: #{tpu_custom_call.1} parent=1 // pred_fallthru
      _
    %p49 = scmp.eq.s32.totalorder 0, 0
    // Predicated region
    $region30: #{tpu_custom_call.1} parent=1 // pred_check
      %p50 = pneg %p49
    $region31: #{tpu_custom_call.1} parent=1 // pred_check_branch
      %52 = sbr.rel (%p50) target = $region33
    $region32: #{tpu_custom_call.1} parent=1 // pred_region
      %v53 = vld [vmem:[#allocation3] sm:$0xff]
      %v54 = vld [vmem:[#allocation3 + $0x8] sm:$0xff]
      %v55 = vld [vmem:[#allocation3 + $0x10] sm:$0xff]
      %v56 = vld [vmem:[#allocation3 + $0x18] sm:$0xff]
      %vm57 = vcmask 261120
      %v58 = vsel %vm57, %v53, 0.0
      %59 = vadd.xlane.f32.xlu0 %v58
      %v60 = vpop.xlane.xlu0 %59
      %v61 = vsel %vm57, %v54, 0.0
      %62 = vadd.xlane.f32.xlu0 %v61
      %v63 = vpop.xlane.xlu0 %62
      %v64 = vsel %vm57, %v55, 0.0
      %65 = vadd.xlane.f32.xlu0 %v64
      %v66 = vpop.xlane.xlu0 %65
      %v67 = vsel %vm57, %v56, 0.0
      %68 = vadd.xlane.f32.xlu0 %v67
      %v69 = vpop.xlane.xlu0 %68
      %v70 = vrcp.pop 32.0
      %v71 = vmul.f32 %v60, %v70
      %v72 = vmul.f32 %v63, %v70
      %v73 = vmul.f32 %v66, %v70
      %v74 = vmul.f32 %v69, %v70
      %v75 = vsub.f32 %v53, %v71
      %v76 = vsub.f32 %v54, %v72
      %v77 = vsub.f32 %v55, %v73
      %v78 = vsub.f32 %v56, %v74
      %v79 = vmul.f32 %v75, %v75
      %v80 = vmul.f32 %v76, %v76
      %v81 = vmul.f32 %v77, %v77
      %v82 = vmul.f32 %v78, %v78
      %v83 = vsel %vm57, %v79, 0.0
      %84 = vadd.xlane.f32.xlu0 %v83
      %v85 = vpop.xlane.xlu0 %84
      %v86 = vsel %vm57, %v80, 0.0
      %87 = vadd.xlane.f32.xlu0 %v86
      %v88 = vpop.xlane.xlu0 %87
      %v89 = vsel %vm57, %v81, 0.0
      %90 = vadd.xlane.f32.xlu0 %v89
      %v91 = vpop.xlane.xlu0 %90
      %v92 = vsel %vm57, %v82, 0.0
      %93 = vadd.xlane.f32.xlu0 %v92
      %v94 = vpop.xlane.xlu0 %93
      %v95 = vmul.f32 %v85, %v70
      %v96 = vmul.f32 %v88, %v70
      %v97 = vmul.f32 %v91, %v70
      %v98 = vmul.f32 %v94, %v70
      %v99 = vadd.f32 %v95, 1e-05
      %v100 = vadd.f32 %v96, 1e-05
      %v101 = vadd.f32 %v97, 1e-05
      %v102 = vadd.f32 %v98, 1e-05
      %v103 = vrsqrt.pop %v99
      %v104 = vrsqrt.pop %v100
      %v105 = vrsqrt.pop %v101
      %v106 = vrsqrt.pop %v102
      %v107 = vmul.f32 %v75, %v103
      %v108 = vmul.f32 %v76, %v104
      %v109 = vmul.f32 %v77, %v105
      %v110 = vmul.f32 %v78, %v106
      %v111 = vld [vmem:[%s1] sm:$0x1]
      %v113 = vlaneseq
      %v114 = vshrl.u32 %v113, 7
      %v115 = vsub.s32 0, %v114
      %v116 = vrot.slane %v111, %v115
      %v118 = vmul.f32 %v107, %v116
      %v119 = vmul.f32 %v108, %v116
      %v120 = vmul.f32 %v109, %v116
      %v121 = vmul.f32 %v110, %v116
      %v122 = vld [vmem:[%s2] sm:$0x1]
      %v124 = vlaneseq
      %v125 = vshrl.u32 %v124, 7
      %v126 = vsub.s32 0, %v125
      %v127 = vrot.slane %v122, %v126
      %v129 = vadd.f32 %v118, %v127
      %v130 = vadd.f32 %v119, %v127
      %v131 = vadd.f32 %v120, %v127
      %v132 = vadd.f32 %v121, %v127
      %133 = vst.msk [vmem:[#allocation2] sm:$0xff] %vm57, %v129
      %134 = vst.msk [vmem:[#allocation2 + $0x8] sm:$0xff] %vm57, %v130
      %135 = vst.msk [vmem:[#allocation2 + $0x10] sm:$0xff] %vm57, %v131
      %136 = vst.msk [vmem:[#allocation2 + $0x18] sm:$0xff] %vm57, %v132
    $region33: #{tpu_custom_call.1} parent=1 // pred_fallthru
      _
    %v137 = vld [vmem:[#allocation2] sm:$0xff]
    %v138 = vld [vmem:[#allocation2 + $0x8] sm:$0xff]
    %v139 = vld [vmem:[#allocation2 + $0x10] sm:$0xff]
    %v140 = vld [vmem:[#allocation2 + $0x18] sm:$0xff]
    %v141 = vld [vmem:[#allocation6] sm:$0xff]
    %v142 = vld [vmem:[#allocation6 + $0x8] sm:$0xff]
    %v143 = vld [vmem:[#allocation6 + $0x10] sm:$0xff]
    %v144 = vld [vmem:[#allocation6 + $0x18] sm:$0xff]
    %v145 = vld [vmem:[%s4] sm:$0x1]
    %v147 = vlaneseq
    %v148 = vshrl.u32 %v147, 7
    %v149 = vsub.s32 0, %v148
    %v150 = vrot.slane %v145, %v149
    %vm152 = vcmask 261120
    %v154 = vsel %vm152, %v137, 0
    %v157 = vsel %vm152, %v138, 0
    %v160 = vsel %vm152, %v139, 0
    %v163 = vsel %vm152, %v140, 0
    %165 = vmatprep.subr.mxu0 0.0
    %166 = vmatpush1.msra.mxu0 0.0
    %167 = vmatprep.subr.mxu0 0.0
    %168 = vmatpush1.msra.mxu0 0.0
    %169 = vmatprep.subr.mxu0 0.0
    %170 = vmatpush1.msra.mxu0 0.0
    %171 = vmatprep.subr.mxu0 0.0
    %172 = vmatpush1.msra.mxu0 0.0
    %173 = vmatprep.subr.mxu0 0.0
    %174 = vmatpush1.msra.mxu0 0.0
    %175 = vmatprep.subr.mxu0 0.0
    %176 = vmatpush1.msra.mxu0 0.0
    %177 = vmatprep.subr.mxu0 0.0
    %178 = vmatpush1.msra.mxu0 0.0
    %179 = vmatprep.subr.mxu0 0.0
    %180 = vmatpush1.msra.mxu0 0.0
    %181 = vmatprep.subr.mxu0 0.0
    %182 = vmatpush1.msra.mxu0 0.0
    %183 = vmatprep.subr.mxu0 0.0
    %184 = vmatpush1.msra.mxu0 0.0
    %185 = vmatprep.subr.mxu0 0.0
    %186 = vmatpush1.msra.mxu0 0.0
    %187 = vmatprep.subr.mxu0 0.0
    %188 = vmatpush1.msra.mxu0 0.0
    %189 = vmatprep.subr.mxu0 0.0
    %190 = vmatpush1.msra.mxu0 %v144
    %191 = vmatprep.subr.mxu0 0.0
    %192 = vmatpush1.msra.mxu0 %v143
    %193 = vmatprep.subr.mxu0 0.0
    %194 = vmatpush1.msra.mxu0 %v142
    %195 = vmatprep.subr.mxu0 0.0
    %196 = vmatpush1.msra.mxu0 %v141
    %197 = vmatprep.subr.mxu0 0.0
    %198 = vmatpush2.msra.mxu0 0.0
    %199 = vmatprep.subr.mxu0 0.0
    %200 = vmatpush2.msra.mxu0 0.0
    %201 = vmatprep.subr.mxu0 0.0
    %202 = vmatpush2.msra.mxu0 0.0
    %203 = vmatprep.subr.mxu0 0.0
    %204 = vmatpush2.msra.mxu0 0.0
    %205 = vmatprep.subr.mxu0 0.0
    %206 = vmatpush2.msra.mxu0 0.0
    %207 = vmatprep.subr.mxu0 0.0
    %208 = vmatpush2.msra.mxu0 0.0
    %209 = vmatprep.subr.mxu0 0.0
    %210 = vmatpush2.msra.mxu0 0.0
    %211 = vmatprep.subr.mxu0 0.0
    %212 = vmatpush2.msra.mxu0 0.0
    %213 = vmatprep.subr.mxu0 0.0
    %214 = vmatpush2.msra.mxu0 0.0
    %215 = vmatprep.subr.mxu0 0.0
    %216 = vmatpush2.msra.mxu0 0.0
    %217 = vmatprep.subr.mxu0 0.0
    %218 = vmatpush2.msra.mxu0 0.0
    %219 = vmatprep.subr.mxu0 0.0
    %220 = vmatpush2.msra.mxu0 0.0
    %221 = vmatprep.subr.mxu0 0.0
    %222 = vmatpush2.msra.mxu0 0.0
    %223 = vmatprep.subr.mxu0 0.0
    %224 = vmatpush2.msra.mxu0 0.0
    %225 = vmatprep.subr.mxu0 0.0
    %226 = vmatpush2.msra.mxu0 0.0
    %227 = vmatprep.subr.mxu0 0.0
    %228 = vmatpush2.msra.mxu0 0.0
    %229 = vmatprep.mubr.f32.mxu0 0.0
    %230 = vmatmul.mubr.f32.gmra.mxu0 %v154
    %v231 = vpop.f32.mrf.mxu0
    %v232 = vadd.f32 %v150, %v231
    %v233 = vpop.f32.mrf.mxu0
    %234 = vmatprep.mubr.f32.mxu0 0.0
    %235 = vmatmul.mubr.f32.gmra.mxu0 %v157
    %v236 = vpop.f32.mrf.mxu0
    %v237 = vadd.f32 %v150, %v236
    %v238 = vpop.f32.mrf.mxu0
    %239 = vmatprep.mubr.f32.mxu0 0.0
    %240 = vmatmul.mubr.f32.gmra.mxu0 %v160
    %v241 = vpop.f32.mrf.mxu0
    %v242 = vadd.f32 %v150, %v241
    %v243 = vpop.f32.mrf.mxu0
    %244 = vmatprep.mubr.f32.mxu0 0.0
    %245 = vmatmul.mubr.f32.gmra.mxu0 %v163
    %v246 = vpop.f32.mrf.mxu0
    %v247 = vadd.f32 %v150, %v246
    %v248 = vpop.f32.mrf.mxu0
    %249 = vdwg.mxu0
    %250 = vst.msk [vmem:[#allocation8] sm:$0xff] %vm152, %v232
    %251 = vst.msk [vmem:[#allocation8 + $0x8] sm:$0xff] %vm152, %v237
    %252 = vst.msk [vmem:[#allocation8 + $0x10] sm:$0xff] %vm152, %v242
    %253 = vst.msk [vmem:[#allocation8 + $0x18] sm:$0xff] %vm152, %v247
    // Predicated region
    $region34: #{tpu_custom_call.1} parent=1 // pred_check
      _
    $region35: #{tpu_custom_call.1} parent=1 // pred_check_branch
      %255 = sbr.rel (0) target = $region37
    $region36: #{tpu_custom_call.1} parent=1 // pred_region
      %s257 = ssub.s32 512, 512
      %258 = vsyncadd [#allocation5], %s257
      %s259 = sshll.u32 [#allocation8], 4
      %s260 = int_to_ptr.vmem [resolvable:$true] %s259
      %265 = dma.vmem_to_hbm [thread:$0]  %s260, 512, %s5, [#allocation5], 128, 128, 8
    $region37: #{tpu_custom_call.1} parent=1 // pred_fallthru
      _
    // Predicated region
    $region38: #{tpu_custom_call.1} parent=1 // pred_check
      _
    $region39: #{tpu_custom_call.1} parent=1 // pred_check_branch
      %267 = sbr.rel (0) target = $region41
    $region40: #{tpu_custom_call.1} parent=1 // pred_region
      %268 = dma.done [#allocation5], 512
    $region41: #{tpu_custom_call.1} parent=1 // pred_fallthru
      _
    %269 = vsyncpa [#allocation4], 1
    %270 = vsyncpa [#allocation7], 1
    %271 = vsyncpa [#allocation5], 1

</llo_original>
